<compile_context>
chip_gen: v7x
topology: tpu7x:2x2x1
jax: 0.10.0
libtpu: 0.0.40
codegen_flags: <defaults>
</compile_context>

<pallas_src>
import jax
import jax.numpy as jnp
from jax.experimental import pallas as pl
from jax.experimental.pallas import tpu as pltpu


def make_kernel(W, HW, pad0):
    """Build the fused HRResBlock kernel for a fixed spatial size (W, HW) and halo pad0."""

    def kernel(x_ref, cm_ref, w1_ref, s1_ref, b1_ref, w2_ref, s2_ref, b2_ref,
               w3_ref, s3_ref, b3_ref, o_ref, pad_ref):
        Cmid = w1_ref.shape[0]

        # ---- conv1 (1x1) + bn1 + relu : (Cmid, Cin) @ (Cin, HW) ----
        h1 = jnp.dot(w1_ref[...], x_ref[0], preferred_element_type=jnp.float32)
        h1 = jnp.maximum(h1 * s1_ref[...] + b1_ref[...], 0.0)          # (Cmid, HW) f32

        # ---- stage h1 into the flat zero-halo scratch (all stores lane-aligned) ----
        # Halos are re-zeroed every step (2 aligned vreg stores) so the kernel stays
        # correct with "parallel" grid semantics (per-core scratch on v7x megacore).
        pad_ref[:, pl.ds(0, pad0)] = jnp.zeros((Cmid, pad0), pad_ref.dtype)
        pad_ref[:, pl.ds(pad0 + HW, pad0)] = jnp.zeros((Cmid, pad0), pad_ref.dtype)
        pad_ref[:, pl.ds(pad0, HW)] = h1

        # ---- conv2 (3x3, padding=1, grouped -> block-diag im2col) + bn2 (no relu) ----
        cm_l = jnp.broadcast_to(cm_ref[0:1, :], (Cmid, HW))   # kills wrap of dx = -1
        cm_r = jnp.broadcast_to(cm_ref[1:2, :], (Cmid, HW))   # kills wrap of dx = +1
        taps = []
        for dy in range(3):
            for dx in range(3):
                # out(y, x) needs in(y + dy - 1, x + dx - 1); the dy part lands in the
                # zero halo when out of range, the dx part needs only the column mask.
                win = pad_ref[:, pl.ds(pad0 + (dy - 1) * W + (dx - 1), HW)]
                if dx == 0:
                    win = win * cm_l
                elif dx == 2:
                    win = win * cm_r
                taps.append(win)
        taps = jnp.concatenate(taps, axis=0).astype(jnp.bfloat16)       # (9*Cmid, HW)
        h2 = jnp.dot(w2_ref[...], taps, preferred_element_type=jnp.float32)
        h2 = h2 * s2_ref[...] + b2_ref[...]                             # (Cmid, HW)

        # ---- conv3 (1x1) + bn3 + relu ----
        h3 = jnp.dot(w3_ref[...], h2.astype(jnp.bfloat16),
                     preferred_element_type=jnp.float32)
        o_ref[0] = jnp.maximum(h3 * s3_ref[...] + b3_ref[...], 0.0).astype(o_ref.dtype)

    return kernel


def hr_res_block(x_nchw, p, min_channels_of_a_grp=4, eps=1e-5):
    """Pallas implementation of HRResBlock.forward (inference-mode BN)."""
    N, Cin, H, W = x_nchw.shape
    mid = p["w1"].shape[0]
    Cout = p["w3"].shape[0]
    groups = mid // min_channels_of_a_grp
    cg = mid // groups
    HW = H * W
    pad0 = ((W + 1 + 127) // 128) * 128        # zero halo >= W+1, lane-aligned

    # NCHW already has spatial last: flatten only, no transposes.
    x = x_nchw.reshape(N, Cin, HW).astype(jnp.bfloat16)

    def fold(gamma, beta, mean, var, conv_bias):
        s = gamma / jnp.sqrt(var + eps)
        b = s * (conv_bias - mean) + beta
        return (s.reshape(-1, 1).astype(jnp.float32),
                b.reshape(-1, 1).astype(jnp.float32))

    w1t = p["w1"][:, :, 0, 0].astype(jnp.bfloat16)          # (mid, Cin)
    w3t = p["w3"][:, :, 0, 0].astype(jnp.bfloat16)          # (Cout, mid)
    s1, b1 = fold(p["g1"], p["be1"], p["m1"], p["v1"], p["cb1"])
    s2, b2 = fold(p["g2"], p["be2"], p["m2"], p["v2"], p["cb2"])
    s3, b3 = fold(p["g3"], p["be3"], p["m3"], p["v3"], p["cb3"])

    # Grouped OIHW (mid, cg, 3, 3) -> block-diagonal dense (mid, mid, 3, 3)
    # -> im2col weight (mid, 9*mid) with K ordered as (dy, dx, ci).
    w2d = jnp.zeros((mid, mid, 3, 3), jnp.float32)
    for g in range(groups):
        w2d = w2d.at[g * cg:(g + 1) * cg, g * cg:(g + 1) * cg].set(
            p["w2"][g * cg:(g + 1) * cg])
    w2r = jnp.transpose(w2d, (0, 2, 3, 1)).reshape(mid, 9 * mid).astype(jnp.bfloat16)

    # 0/1 masks killing the single row-wrapped column of the dx = -1 / dx = +1 shifts.
    xs = jnp.arange(HW, dtype=jnp.int32) % W
    colmask = jnp.stack([(xs != 0), (xs != W - 1)]).astype(jnp.float32)   # (2, HW)

    kernel = make_kernel(W, HW, pad0)

    def full(shape):
        return pl.BlockSpec(shape, lambda b, _n=len(shape): (0,) * _n)

    out = pl.pallas_call(
        kernel,
        out_shape=jax.ShapeDtypeStruct((N, Cout, HW), jnp.float32),
        grid_spec=pltpu.PrefetchScalarGridSpec(
            num_scalar_prefetch=0,
            grid=(N,),
            in_specs=[
                pl.BlockSpec((1, Cin, HW), lambda b: (b, 0, 0)),       # x
                full((2, HW)),                                         # column masks
                full((mid, Cin)), full((mid, 1)), full((mid, 1)),      # conv1 / bn1
                full((mid, 9 * mid)), full((mid, 1)), full((mid, 1)),  # conv2 / bn2
                full((Cout, mid)), full((Cout, 1)), full((Cout, 1)),   # conv3 / bn3
            ],
            out_specs=pl.BlockSpec((1, Cout, HW), lambda b: (b, 0, 0)),
            scratch_shapes=[pltpu.VMEM((mid, 2 * pad0 + HW), jnp.float32)],
        ),
        compiler_params=pltpu.CompilerParams(
            dimension_semantics=("parallel",)),    # batch images independent (v7x: 2 TCs)
    )(x, colmask, w1t, s1, b1, w2r, s2, b2, w3t, s3, b3)

    return out.reshape(N, Cout, H, W)


def ref_forward(x, p, groups, eps=1e-5):
    """Pure-JAX (XLA) reference in NCHW, mirroring the PyTorch module."""
    dn = ("NCHW", "OIHW", "NCHW")
    prec = jax.lax.Precision.HIGHEST

    def bn(z, g, b, m, v):
        return (g[None, :, None, None] * (z - m[None, :, None, None])
                / jnp.sqrt(v[None, :, None, None] + eps) + b[None, :, None, None])

    z = jax.lax.conv_general_dilated(x, p["w1"], (1, 1), "VALID",
                                     dimension_numbers=dn, precision=prec)
    z = z + p["cb1"][None, :, None, None]
    z = jnp.maximum(bn(z, p["g1"], p["be1"], p["m1"], p["v1"]), 0.0)

    z = jax.lax.conv_general_dilated(z, p["w2"], (1, 1), ((1, 1), (1, 1)),
                                     dimension_numbers=dn,
                                     feature_group_count=groups, precision=prec)
    z = z + p["cb2"][None, :, None, None]
    z = bn(z, p["g2"], p["be2"], p["m2"], p["v2"])

    z = jax.lax.conv_general_dilated(z, p["w3"], (1, 1), "VALID",
                                     dimension_numbers=dn, precision=prec)
    z = z + p["cb3"][None, :, None, None]
    z = jnp.maximum(bn(z, p["g3"], p["be3"], p["m3"], p["v3"]), 0.0)
    return z


if __name__ == "__main__":
    N, Cin, H, W = 2, 8, 16, 16
    Cout = 8
    min_grp = 4
    mid = min(Cin, Cout)
    groups = mid // min_grp  # 2

    key = jax.random.PRNGKey(0)
    ks = jax.random.split(key, 19)

    def nrm(k, shape, scale=0.3):
        return scale * jax.random.normal(k, shape, jnp.float32)

    p = dict(
        # conv1: (mid, Cin, 1, 1) + bias / bn1 gamma, beta, running mean/var
        w1=nrm(ks[0], (mid, Cin, 1, 1)), cb1=nrm(ks[1], (mid,), 0.1),
        g1=1.0 + nrm(ks[2], (mid,), 0.1), be1=nrm(ks[3], (mid,), 0.1),
        m1=nrm(ks[4], (mid,), 0.1), v1=0.5 + jnp.abs(nrm(ks[5], (mid,), 0.2)),
        # conv2: grouped 3x3, (mid, mid//groups, 3, 3) + bias / bn2
        w2=nrm(ks[6], (mid, mid // groups, 3, 3)), cb2=nrm(ks[7], (mid,), 0.1),
        g2=1.0 + nrm(ks[8], (mid,), 0.1), be2=nrm(ks[9], (mid,), 0.1),
        m2=nrm(ks[10], (mid,), 0.1), v2=0.5 + jnp.abs(nrm(ks[11], (mid,), 0.2)),
        # conv3: (Cout, mid, 1, 1) + bias / bn3
        w3=nrm(ks[12], (Cout, mid, 1, 1)), cb3=nrm(ks[13], (Cout,), 0.1),
        g3=1.0 + nrm(ks[14], (Cout,), 0.1), be3=nrm(ks[15], (Cout,), 0.1),
        m3=nrm(ks[16], (Cout,), 0.1), v3=0.5 + jnp.abs(nrm(ks[17], (Cout,), 0.2)),
    )
    x = jax.random.normal(ks[18], (N, Cin, H, W), jnp.float32)

    out = jax.block_until_ready(hr_res_block(x, p, min_channels_of_a_grp=min_grp))

    ref = ref_forward(x, p, groups)
    assert out.shape == ref.shape == (N, Cout, H, W)
    max_err = float(jnp.max(jnp.abs(out - ref)))
    # bf16 MXU matmuls (f32 accumulation) vs an f32 HIGHEST-precision XLA reference ->
    # slightly loosened tolerance; real layout/indexing bugs produce O(1) errors.
    if not bool(jnp.allclose(out, ref, atol=1e-1, rtol=5e-2)):
        raise AssertionError(f"Pallas kernel mismatch vs reference, max abs err {max_err}")
    print("KERNEL_OK")
</pallas_src>

<mosaic_0001>
module attributes {stable_mosaic.version = 11 : i64} {
  func.func @kernel(%arg0: i32, %arg1: memref<1x8x256xbf16, #tpu.memory_space<vmem>>, %arg2: memref<2x256xf32, #tpu.memory_space<vmem>>, %arg3: memref<8x8xbf16, #tpu.memory_space<vmem>>, %arg4: memref<8x1xf32, #tpu.memory_space<vmem>>, %arg5: memref<8x1xf32, #tpu.memory_space<vmem>>, %arg6: memref<8x72xbf16, #tpu.memory_space<vmem>>, %arg7: memref<8x1xf32, #tpu.memory_space<vmem>>, %arg8: memref<8x1xf32, #tpu.memory_space<vmem>>, %arg9: memref<8x8xbf16, #tpu.memory_space<vmem>>, %arg10: memref<8x1xf32, #tpu.memory_space<vmem>>, %arg11: memref<8x1xf32, #tpu.memory_space<vmem>>, %arg12: memref<1x8x256xf32, #tpu.memory_space<vmem>>, %arg13: memref<8x512xf32, #tpu.memory_space<vmem>>) attributes {dimension_semantics = [#tpu.dimension_semantics<parallel>], iteration_bounds = array<i64: 2>, scalar_prefetch = 0 : i64, scratch_operands = 1 : i64, tpu.core_type = #tpu.core_type<tc>, window_params = [{transform_indices = @transform_0, window_bounds = array<i64: 1, 8, 256>}, {pipeline_mode = #tpu.pipeline_mode<synchronous>, transform_indices = @transform_1, window_bounds = array<i64: 2, 256>}, {pipeline_mode = #tpu.pipeline_mode<synchronous>, transform_indices = @transform_2, window_bounds = array<i64: 8, 8>}, {pipeline_mode = #tpu.pipeline_mode<synchronous>, transform_indices = @transform_3, window_bounds = array<i64: 8, 1>}, {pipeline_mode = #tpu.pipeline_mode<synchronous>, transform_indices = @transform_4, window_bounds = array<i64: 8, 1>}, {pipeline_mode = #tpu.pipeline_mode<synchronous>, transform_indices = @transform_5, window_bounds = array<i64: 8, 72>}, {pipeline_mode = #tpu.pipeline_mode<synchronous>, transform_indices = @transform_6, window_bounds = array<i64: 8, 1>}, {pipeline_mode = #tpu.pipeline_mode<synchronous>, transform_indices = @transform_7, window_bounds = array<i64: 8, 1>}, {pipeline_mode = #tpu.pipeline_mode<synchronous>, transform_indices = @transform_8, window_bounds = array<i64: 8, 8>}, {pipeline_mode = #tpu.pipeline_mode<synchronous>, transform_indices = @transform_9, window_bounds = array<i64: 8, 1>}, {pipeline_mode = #tpu.pipeline_mode<synchronous>, transform_indices = @transform_10, window_bounds = array<i64: 8, 1>}, {transform_indices = @transform_11, window_bounds = array<i64: 1, 8, 256>}]} {
    %c0 = arith.constant 0 : index
    %c0_0 = arith.constant 0 : index
    %0 = vector.load %arg3[%c0, %c0_0] : memref<8x8xbf16, #tpu.memory_space<vmem>>, vector<8x8xbf16>
    %c0_1 = arith.constant 0 : index
    %c0_2 = arith.constant 0 : index
    %c0_3 = arith.constant 0 : index
    %1 = vector.load %arg1[%c0_1, %c0_2, %c0_3] : memref<1x8x256xbf16, #tpu.memory_space<vmem>>, vector<1x8x256xbf16>
    %2 = vector.shape_cast %1 : vector<1x8x256xbf16> to vector<8x256xbf16>
    %cst = arith.constant dense<0.000000e+00> : vector<8x256xf32>
    %3 = tpu.matmul %0, %2, %cst {dimension_numbers = #tpu.dot_dimension_numbers<[1], [0], [0], [1], [0, 0, 1, 1], [], []>} : vector<8x8xbf16>, vector<8x256xbf16>, vector<8x256xf32> -> vector<8x256xf32>
    %c0_4 = arith.constant 0 : index
    %c0_5 = arith.constant 0 : index
    %4 = vector.load %arg4[%c0_4, %c0_5] : memref<8x1xf32, #tpu.memory_space<vmem>>, vector<8x1xf32>
    %5 = vector.broadcast %4 : vector<8x1xf32> to vector<8x256xf32>
    %6 = arith.mulf %3, %5 : vector<8x256xf32>
    %c0_6 = arith.constant 0 : index
    %c0_7 = arith.constant 0 : index
    %7 = vector.load %arg5[%c0_6, %c0_7] : memref<8x1xf32, #tpu.memory_space<vmem>>, vector<8x1xf32>
    %8 = vector.broadcast %7 : vector<8x1xf32> to vector<8x256xf32>
    %9 = arith.addf %6, %8 : vector<8x256xf32>
    %cst_8 = arith.constant 0.000000e+00 : f32
    %10 = vector.broadcast %cst_8 : f32 to vector<8x256xf32>
    %11 = arith.maximumf %9, %10 : vector<8x256xf32>
    %cst_9 = arith.constant 0.000000e+00 : f32
    %12 = vector.broadcast %cst_9 : f32 to vector<8x128xf32>
    %c0_10 = arith.constant 0 : index
    %c0_11 = arith.constant 0 : index
    %13 = vector.load %arg13[%c0_10, %c0_11] : memref<8x512xf32, #tpu.memory_space<vmem>>, vector<8x128xf32>
    tpu.vector_store %arg13[%c0_10, %c0_11], %12 {strides = array<i32>} : memref<8x512xf32, #tpu.memory_space<vmem>>, vector<8x128xf32>,
    %cst_12 = arith.constant 0.000000e+00 : f32
    %14 = vector.broadcast %cst_12 : f32 to vector<8x128xf32>
    %c0_13 = arith.constant 0 : index
    %c384 = arith.constant 384 : index
    %15 = vector.load %arg13[%c0_13, %c384] : memref<8x512xf32, #tpu.memory_space<vmem>>, vector<8x128xf32>
    tpu.vector_store %arg13[%c0_13, %c384], %14 {strides = array<i32>} : memref<8x512xf32, #tpu.memory_space<vmem>>, vector<8x128xf32>,
    %c0_14 = arith.constant 0 : index
    %c128 = arith.constant 128 : index
    %16 = vector.load %arg13[%c0_14, %c128] : memref<8x512xf32, #tpu.memory_space<vmem>>, vector<8x256xf32>
    tpu.vector_store %arg13[%c0_14, %c128], %11 {strides = array<i32>} : memref<8x512xf32, #tpu.memory_space<vmem>>, vector<8x256xf32>,
    %c0_15 = arith.constant 0 : index
    %c0_16 = arith.constant 0 : index
    %17 = vector.load %arg2[%c0_15, %c0_16] : memref<2x256xf32, #tpu.memory_space<vmem>>, vector<1x256xf32>
    %18 = vector.shape_cast %17 : vector<1x256xf32> to vector<1x256xf32>
    %19 = vector.broadcast %18 : vector<1x256xf32> to vector<8x256xf32>
    %c1 = arith.constant 1 : index
    %c0_17 = arith.constant 0 : index
    %20 = vector.load %arg2[%c1, %c0_17] : memref<2x256xf32, #tpu.memory_space<vmem>>, vector<1x256xf32>
    %21 = vector.shape_cast %20 : vector<1x256xf32> to vector<1x256xf32>
    %22 = vector.broadcast %21 : vector<1x256xf32> to vector<8x256xf32>
    %c0_18 = arith.constant 0 : index
    %c111 = arith.constant 111 : index
    %23 = vector.load %arg13[%c0_18, %c111] : memref<8x512xf32, #tpu.memory_space<vmem>>, vector<8x256xf32>
    %24 = arith.mulf %23, %19 : vector<8x256xf32>
    %c0_19 = arith.constant 0 : index
    %c112 = arith.constant 112 : index
    %25 = vector.load %arg13[%c0_19, %c112] : memref<8x512xf32, #tpu.memory_space<vmem>>, vector<8x256xf32>
    %c0_20 = arith.constant 0 : index
    %c113 = arith.constant 113 : index
    %26 = vector.load %arg13[%c0_20, %c113] : memref<8x512xf32, #tpu.memory_space<vmem>>, vector<8x256xf32>
    %27 = arith.mulf %26, %22 : vector<8x256xf32>
    %c0_21 = arith.constant 0 : index
    %c127 = arith.constant 127 : index
    %28 = vector.load %arg13[%c0_21, %c127] : memref<8x512xf32, #tpu.memory_space<vmem>>, vector<8x256xf32>
    %29 = arith.mulf %28, %19 : vector<8x256xf32>
    %c0_22 = arith.constant 0 : index
    %c128_23 = arith.constant 128 : index
    %30 = vector.load %arg13[%c0_22, %c128_23] : memref<8x512xf32, #tpu.memory_space<vmem>>, vector<8x256xf32>
    %c0_24 = arith.constant 0 : index
    %c129 = arith.constant 129 : index
    %31 = vector.load %arg13[%c0_24, %c129] : memref<8x512xf32, #tpu.memory_space<vmem>>, vector<8x256xf32>
    %32 = arith.mulf %31, %22 : vector<8x256xf32>
    %c0_25 = arith.constant 0 : index
    %c143 = arith.constant 143 : index
    %33 = vector.load %arg13[%c0_25, %c143] : memref<8x512xf32, #tpu.memory_space<vmem>>, vector<8x256xf32>
    %34 = arith.mulf %33, %19 : vector<8x256xf32>
    %c0_26 = arith.constant 0 : index
    %c144 = arith.constant 144 : index
    %35 = vector.load %arg13[%c0_26, %c144] : memref<8x512xf32, #tpu.memory_space<vmem>>, vector<8x256xf32>
    %c0_27 = arith.constant 0 : index
    %c145 = arith.constant 145 : index
    %36 = vector.load %arg13[%c0_27, %c145] : memref<8x512xf32, #tpu.memory_space<vmem>>, vector<8x256xf32>
    %37 = arith.mulf %36, %22 : vector<8x256xf32>
    %38 = tpu.concatenate %24, %25, %27, %29, %30, %32, %34, %35, %37 in 0 : vector<8x256xf32>, vector<8x256xf32>, vector<8x256xf32>, vector<8x256xf32>, vector<8x256xf32>, vector<8x256xf32>, vector<8x256xf32>, vector<8x256xf32>, vector<8x256xf32> -> vector<72x256xf32>
    %39 = arith.truncf %38 : vector<72x256xf32> to vector<72x256xbf16>
    %c0_28 = arith.constant 0 : index
    %c0_29 = arith.constant 0 : index
    %40 = vector.load %arg6[%c0_28, %c0_29] : memref<8x72xbf16, #tpu.memory_space<vmem>>, vector<8x72xbf16>
    %cst_30 = arith.constant dense<0.000000e+00> : vector<8x256xf32>
    %41 = tpu.matmul %40, %39, %cst_30 {dimension_numbers = #tpu.dot_dimension_numbers<[1], [0], [0], [1], [0, 0, 1, 1], [], []>} : vector<8x72xbf16>, vector<72x256xbf16>, vector<8x256xf32> -> vector<8x256xf32>
    %c0_31 = arith.constant 0 : index
    %c0_32 = arith.constant 0 : index
    %42 = vector.load %arg7[%c0_31, %c0_32] : memref<8x1xf32, #tpu.memory_space<vmem>>, vector<8x1xf32>
    %43 = vector.broadcast %42 : vector<8x1xf32> to vector<8x256xf32>
    %44 = arith.mulf %41, %43 : vector<8x256xf32>
    %c0_33 = arith.constant 0 : index
    %c0_34 = arith.constant 0 : index
    %45 = vector.load %arg8[%c0_33, %c0_34] : memref<8x1xf32, #tpu.memory_space<vmem>>, vector<8x1xf32>
    %46 = vector.broadcast %45 : vector<8x1xf32> to vector<8x256xf32>
    %47 = arith.addf %44, %46 : vector<8x256xf32>
    %c0_35 = arith.constant 0 : index
    %c0_36 = arith.constant 0 : index
    %48 = vector.load %arg9[%c0_35, %c0_36] : memref<8x8xbf16, #tpu.memory_space<vmem>>, vector<8x8xbf16>
    %49 = arith.truncf %47 : vector<8x256xf32> to vector<8x256xbf16>
    %cst_37 = arith.constant dense<0.000000e+00> : vector<8x256xf32>
    %50 = tpu.matmul %48, %49, %cst_37 {dimension_numbers = #tpu.dot_dimension_numbers<[1], [0], [0], [1], [0, 0, 1, 1], [], []>} : vector<8x8xbf16>, vector<8x256xbf16>, vector<8x256xf32> -> vector<8x256xf32>
    %c0_38 = arith.constant 0 : index
    %c0_39 = arith.constant 0 : index
    %51 = vector.load %arg10[%c0_38, %c0_39] : memref<8x1xf32, #tpu.memory_space<vmem>>, vector<8x1xf32>
    %52 = vector.broadcast %51 : vector<8x1xf32> to vector<8x256xf32>
    %53 = arith.mulf %50, %52 : vector<8x256xf32>
    %c0_40 = arith.constant 0 : index
    %c0_41 = arith.constant 0 : index
    %54 = vector.load %arg11[%c0_40, %c0_41] : memref<8x1xf32, #tpu.memory_space<vmem>>, vector<8x1xf32>
    %55 = vector.broadcast %54 : vector<8x1xf32> to vector<8x256xf32>
    %56 = arith.addf %53, %55 : vector<8x256xf32>
    %cst_42 = arith.constant 0.000000e+00 : f32
    %57 = vector.broadcast %cst_42 : f32 to vector<8x256xf32>
    %58 = arith.maximumf %56, %57 : vector<8x256xf32>
    %c0_43 = arith.constant 0 : index
    %c0_44 = arith.constant 0 : index
    %c0_45 = arith.constant 0 : index
    %59 = vector.load %arg12[%c0_43, %c0_44, %c0_45] : memref<1x8x256xf32, #tpu.memory_space<vmem>>, vector<1x8x256xf32>
    %60 = vector.shape_cast %59 : vector<1x8x256xf32> to vector<8x256xf32>
    %61 = vector.shape_cast %58 : vector<8x256xf32> to vector<1x8x256xf32>
    tpu.vector_store %arg12[%c0_43, %c0_44, %c0_45], %61 {strides = array<i32>} : memref<1x8x256xf32, #tpu.memory_space<vmem>>, vector<1x8x256xf32>,
    return
  }
  func.func @transform_0(%arg0: i32) -> (i32, i32, i32) {
    %c0_i32 = arith.constant 0 : i32
    %c0_i32_0 = arith.constant 0 : i32
    %c0_i32_1 = arith.constant 0 : i32
    return %arg0, %c0_i32, %c0_i32_0 : i32, i32, i32
  }
  func.func @transform_1(%arg0: i32) -> (i32, i32) {
    %c0_i32 = arith.constant 0 : i32
    %c0_i32_0 = arith.constant 0 : i32
    %c0_i32_1 = arith.constant 0 : i32
    return %c0_i32, %c0_i32_0 : i32, i32
  }
  func.func @transform_2(%arg0: i32) -> (i32, i32) {
    %c0_i32 = arith.constant 0 : i32
    %c0_i32_0 = arith.constant 0 : i32
    %c0_i32_1 = arith.constant 0 : i32
    return %c0_i32, %c0_i32_0 : i32, i32
  }
  func.func @transform_3(%arg0: i32) -> (i32, i32) {
    %c0_i32 = arith.constant 0 : i32
    %c0_i32_0 = arith.constant 0 : i32
    %c0_i32_1 = arith.constant 0 : i32
    return %c0_i32, %c0_i32_0 : i32, i32
  }
  func.func @transform_4(%arg0: i32) -> (i32, i32) {
    %c0_i32 = arith.constant 0 : i32
    %c0_i32_0 = arith.constant 0 : i32
    %c0_i32_1 = arith.constant 0 : i32
    return %c0_i32, %c0_i32_0 : i32, i32
  }
  func.func @transform_5(%arg0: i32) -> (i32, i32) {
    %c0_i32 = arith.constant 0 : i32
    %c0_i32_0 = arith.constant 0 : i32
    %c0_i32_1 = arith.constant 0 : i32
    return %c0_i32, %c0_i32_0 : i32, i32
  }
  func.func @transform_6(%arg0: i32) -> (i32, i32) {
    %c0_i32 = arith.constant 0 : i32
    %c0_i32_0 = arith.constant 0 : i32
    %c0_i32_1 = arith.constant 0 : i32
    return %c0_i32, %c0_i32_0 : i32, i32
  }
  func.func @transform_7(%arg0: i32) -> (i32, i32) {
    %c0_i32 = arith.constant 0 : i32
    %c0_i32_0 = arith.constant 0 : i32
    %c0_i32_1 = arith.constant 0 : i32
    return %c0_i32, %c0_i32_0 : i32, i32
  }
  func.func @transform_8(%arg0: i32) -> (i32, i32) {
    %c0_i32 = arith.constant 0 : i32
    %c0_i32_0 = arith.constant 0 : i32
    %c0_i32_1 = arith.constant 0 : i32
    return %c0_i32, %c0_i32_0 : i32, i32
  }
  func.func @transform_9(%arg0: i32) -> (i32, i32) {
    %c0_i32 = arith.constant 0 : i32
    %c0_i32_0 = arith.constant 0 : i32
    %c0_i32_1 = arith.constant 0 : i32
    return %c0_i32, %c0_i32_0 : i32, i32
  }
  func.func @transform_10(%arg0: i32) -> (i32, i32) {
    %c0_i32 = arith.constant 0 : i32
    %c0_i32_0 = arith.constant 0 : i32
    %c0_i32_1 = arith.constant 0 : i32
    return %c0_i32, %c0_i32_0 : i32, i32
  }
  func.func @transform_11(%arg0: i32) -> (i32, i32, i32) {
    %c0_i32 = arith.constant 0 : i32
    %c0_i32_0 = arith.constant 0 : i32
    %c0_i32_1 = arith.constant 0 : i32
    return %arg0, %c0_i32, %c0_i32_0 : i32, i32, i32
  }
}

</mosaic_0001>

<llo_original>
// kernel: tpu_custom_call.1
$region0: #{tpu_custom_call.1}
  #allocation0 [shape = 'u32[]', space=smem, size = 0x4, offset = 0x4, fixed_abs, tag = 'smem constant byte address 0x4 - core index']
  #allocation1 [shape = 'u32[144,128]{1,0:T(1,128)}', space=vmem, size = 0x12000, scoped, tag = 'internal scratch']
  #allocation2 [shape = 'f32[8,512]{1,0:T(8,128)}', space=vmem, size = 0x4000, scoped, tag = 'scratch operand']
  %s0 = inlined_call_operand.vmem [shape: bf16[2,8,256], index: 0, kind: input, shape index: {}]
  %s1 = inlined_call_operand.vmem [shape: f32[2,256], index: 1, kind: input, shape index: {}]
  %s2 = inlined_call_operand.vmem [shape: bf16[8,8], index: 2, kind: input, shape index: {}]
  %s3 = inlined_call_operand.vmem [shape: f32[8,1], index: 3, kind: input, shape index: {}]
  %s4 = inlined_call_operand.vmem [shape: f32[8,1], index: 4, kind: input, shape index: {}]
  %s5 = inlined_call_operand.vmem [shape: bf16[8,72], index: 5, kind: input, shape index: {}]
  %s6 = inlined_call_operand.vmem [shape: f32[8,1], index: 6, kind: input, shape index: {}]
  %s7 = inlined_call_operand.vmem [shape: f32[8,1], index: 7, kind: input, shape index: {}]
  %s8 = inlined_call_operand.vmem [shape: bf16[8,8], index: 8, kind: input, shape index: {}]
  %s9 = inlined_call_operand.vmem [shape: f32[8,1], index: 9, kind: input, shape index: {}]
  %s10 = inlined_call_operand.vmem [shape: f32[8,1], index: 10, kind: input, shape index: {}]
  %s11 = inlined_call_operand.hbm [shape: f32[2,8,256], index: 11, kind: output, shape index: {}]
  %s12 = sld [smem:[#allocation0]]
  $region77: #{tpu_custom_call.1} parent=0
    _
  %s14 = ssub.s32 1, %s12
  %s15 = scalar_select 0, %s14, %s12
  $region1: #{tpu_custom_call.1} parent=0
    #allocation3 [shape = 'u8[16384]{0}', space=vmem, size = 0x4000, scoped, tag = 'output window, operand 0']
    #allocation4 [shape = 's32[2]{0}', space=sflag, size = 0x8, scoped, tag = 'scoped memory for tpu_custom_call.1']
    %16 = vsyncpa [#allocation4], 0
    %s17 = scalar_lea.sflag [#allocation4], 1
    %18 = vsyncpa %s17, 0
    loop: start=0, step=1, limit=4
    $region2: #{tpu_custom_call.1} parent=1 // loop_pre_header
      _
    $region3: #{tpu_custom_call.1} parent=1 // loop_header
      %s20 = sphi 0, %s24
      %p21 = scmp.ge.s32.totalorder %s20, 4
      %s30 = sphi 0, %s32
      %s33 = sphi 0, %s30
      %s34 = sphi 0, %s33
      %s50 = sphi 0, %s34
      %s54 = sphi 0, %s54
      %s56 = sphi 0, %s54
      %s57 = sphi 0, %s56
      %s71 = sphi 0, %s57
      %s75 = sphi 0, %s75
      %s77 = sphi 0, %s75
      %s78 = sphi 0, %s77
      %s92 = sphi 0, %s78
      %s96 = sphi 0, %s96
      %s98 = sphi 0, %s96
      %s99 = sphi 0, %s98
      %s113 = sphi 0, %s99
      %s117 = sphi 0, %s117
      %s119 = sphi 0, %s117
      %s120 = sphi 0, %s119
      %s134 = sphi 0, %s120
      %s138 = sphi 0, %s138
      %s140 = sphi 0, %s138
      %s141 = sphi 0, %s140
      %s155 = sphi 0, %s141
      %s159 = sphi 0, %s159
      %s161 = sphi 0, %s159
      %s162 = sphi 0, %s161
      %s176 = sphi 0, %s162
      %s180 = sphi 0, %s180
      %s182 = sphi 0, %s180
      %s183 = sphi 0, %s182
      %s197 = sphi 0, %s183
      %s201 = sphi 0, %s201
      %s203 = sphi 0, %s201
      %s204 = sphi 0, %s203
      %s218 = sphi 0, %s204
      %s222 = sphi 0, %s222
      %s224 = sphi 0, %s222
      %s225 = sphi 0, %s224
      %s239 = sphi 0, %s225
      %s243 = sphi 0, %s243
      %s245 = sphi 0, %s243
      %s246 = sphi 0, %s245
      %s260 = sphi 0, %s246
      %s266 = sphi 0, %s268
      %s269 = sphi 0, %s266
      %s270 = sphi 0, %s269
      %s286 = sphi 0, %s270
    $region4: #{tpu_custom_call.1} parent=1 // loop_header_branch
      %23 = sbr.rel (%p21) target = $region8
    $region5: #{tpu_custom_call.1} parent=1 // loop_body
      %s25 = ssub.s32 %s20, 1
      %s26 = ssub.s32 %s20, 2
      %s27 = sadd.s32 %s20, 1
      %s28 = ssub.s32 %s20, %s27
      %p29 = scmp.eq.s32.totalorder %s28, 0
      %s31 = sadd.s32 %s30, 1
      %s32 = scalar_select %p29, %s30, %s31
      %p35 = pneg %p29
      %p36 = scmp.eq.s32.totalorder %s20, 1
      %p37 = por %p35, %p36
      %p38 = scmp.ne.s32.totalorder %s30, %s33
      %p39 = scmp.eq.s32.totalorder %s20, 0
      %p40 = por %p38, %p39
      %p41 = scmp.ne.s32.totalorder %s30, %s33
      %p42 = scmp.eq.s32.totalorder %s25, 1
      %p43 = por %p41, %p42
      %p44 = scmp.ne.s32.totalorder %s33, %s34
      %p45 = scmp.eq.s32.totalorder %s25, 0
      %p46 = por %p44, %p45
      %p47 = scmp.ne.s32.totalorder %s33, %s34
      %p48 = scmp.eq.s32.totalorder %s26, 1
      %p49 = por %p47, %p48
      %p51 = scmp.ne.s32.totalorder %s34, %s50
      %p52 = scmp.eq.s32.totalorder %s26, 0
      %p53 = por %p51, %p52
      %s55 = sadd.s32 %s54, 1
      %p58 = scmp.eq.s32.totalorder %s20, 1
      %p59 = scmp.ne.s32.totalorder %s54, %s56
      %p60 = scmp.eq.s32.totalorder %s20, 0
      %p61 = por %p59, %p60
      %p62 = scmp.ne.s32.totalorder %s54, %s56
      %p63 = scmp.eq.s32.totalorder %s25, 1
      %p64 = por %p62, %p63
      %p65 = scmp.ne.s32.totalorder %s56, %s57
      %p66 = scmp.eq.s32.totalorder %s25, 0
      %p67 = por %p65, %p66
      %p68 = scmp.ne.s32.totalorder %s56, %s57
      %p69 = scmp.eq.s32.totalorder %s26, 1
      %p70 = por %p68, %p69
      %p72 = scmp.ne.s32.totalorder %s57, %s71
      %p73 = scmp.eq.s32.totalorder %s26, 0
      %p74 = por %p72, %p73
      %s76 = sadd.s32 %s75, 1
      %p79 = scmp.eq.s32.totalorder %s20, 1
      %p80 = scmp.ne.s32.totalorder %s75, %s77
      %p81 = scmp.eq.s32.totalorder %s20, 0
      %p82 = por %p80, %p81
      %p83 = scmp.ne.s32.totalorder %s75, %s77
      %p84 = scmp.eq.s32.totalorder %s25, 1
      %p85 = por %p83, %p84
      %p86 = scmp.ne.s32.totalorder %s77, %s78
      %p87 = scmp.eq.s32.totalorder %s25, 0
      %p88 = por %p86, %p87
      %p89 = scmp.ne.s32.totalorder %s77, %s78
      %p90 = scmp.eq.s32.totalorder %s26, 1
      %p91 = por %p89, %p90
      %p93 = scmp.ne.s32.totalorder %s78, %s92
      %p94 = scmp.eq.s32.totalorder %s26, 0
      %p95 = por %p93, %p94
      %s97 = sadd.s32 %s96, 1
      %p100 = scmp.eq.s32.totalorder %s20, 1
      %p101 = scmp.ne.s32.totalorder %s96, %s98
      %p102 = scmp.eq.s32.totalorder %s20, 0
      %p103 = por %p101, %p102
      %p104 = scmp.ne.s32.totalorder %s96, %s98
      %p105 = scmp.eq.s32.totalorder %s25, 1
      %p106 = por %p104, %p105
      %p107 = scmp.ne.s32.totalorder %s98, %s99
      %p108 = scmp.eq.s32.totalorder %s25, 0
      %p109 = por %p107, %p108
      %p110 = scmp.ne.s32.totalorder %s98, %s99
      %p111 = scmp.eq.s32.totalorder %s26, 1
      %p112 = por %p110, %p111
      %p114 = scmp.ne.s32.totalorder %s99, %s113
      %p115 = scmp.eq.s32.totalorder %s26, 0
      %p116 = por %p114, %p115
      %s118 = sadd.s32 %s117, 1
      %p121 = scmp.eq.s32.totalorder %s20, 1
      %p122 = scmp.ne.s32.totalorder %s117, %s119
      %p123 = scmp.eq.s32.totalorder %s20, 0
      %p124 = por %p122, %p123
      %p125 = scmp.ne.s32.totalorder %s117, %s119
      %p126 = scmp.eq.s32.totalorder %s25, 1
      %p127 = por %p125, %p126
      %p128 = scmp.ne.s32.totalorder %s119, %s120
      %p129 = scmp.eq.s32.totalorder %s25, 0
      %p130 = por %p128, %p129
      %p131 = scmp.ne.s32.totalorder %s119, %s120
      %p132 = scmp.eq.s32.totalorder %s26, 1
      %p133 = por %p131, %p132
      %p135 = scmp.ne.s32.totalorder %s120, %s134
      %p136 = scmp.eq.s32.totalorder %s26, 0
      %p137 = por %p135, %p136
      %s139 = sadd.s32 %s138, 1
      %p142 = scmp.eq.s32.totalorder %s20, 1
      %p143 = scmp.ne.s32.totalorder %s138, %s140
      %p144 = scmp.eq.s32.totalorder %s20, 0
      %p145 = por %p143, %p144
      %p146 = scmp.ne.s32.totalorder %s138, %s140
      %p147 = scmp.eq.s32.totalorder %s25, 1
      %p148 = por %p146, %p147
      %p149 = scmp.ne.s32.totalorder %s140, %s141
      %p150 = scmp.eq.s32.totalorder %s25, 0
      %p151 = por %p149, %p150
      %p152 = scmp.ne.s32.totalorder %s140, %s141
      %p153 = scmp.eq.s32.totalorder %s26, 1
      %p154 = por %p152, %p153
      %p156 = scmp.ne.s32.totalorder %s141, %s155
      %p157 = scmp.eq.s32.totalorder %s26, 0
      %p158 = por %p156, %p157
      %s160 = sadd.s32 %s159, 1
      %p163 = scmp.eq.s32.totalorder %s20, 1
      %p164 = scmp.ne.s32.totalorder %s159, %s161
      %p165 = scmp.eq.s32.totalorder %s20, 0
      %p166 = por %p164, %p165
      %p167 = scmp.ne.s32.totalorder %s159, %s161
      %p168 = scmp.eq.s32.totalorder %s25, 1
      %p169 = por %p167, %p168
      %p170 = scmp.ne.s32.totalorder %s161, %s162
      %p171 = scmp.eq.s32.totalorder %s25, 0
      %p172 = por %p170, %p171
      %p173 = scmp.ne.s32.totalorder %s161, %s162
      %p174 = scmp.eq.s32.totalorder %s26, 1
      %p175 = por %p173, %p174
      %p177 = scmp.ne.s32.totalorder %s162, %s176
      %p178 = scmp.eq.s32.totalorder %s26, 0
      %p179 = por %p177, %p178
      %s181 = sadd.s32 %s180, 1
      %p184 = scmp.eq.s32.totalorder %s20, 1
      %p185 = scmp.ne.s32.totalorder %s180, %s182
      %p186 = scmp.eq.s32.totalorder %s20, 0
      %p187 = por %p185, %p186
      %p188 = scmp.ne.s32.totalorder %s180, %s182
      %p189 = scmp.eq.s32.totalorder %s25, 1
      %p190 = por %p188, %p189
      %p191 = scmp.ne.s32.totalorder %s182, %s183
      %p192 = scmp.eq.s32.totalorder %s25, 0
      %p193 = por %p191, %p192
      %p194 = scmp.ne.s32.totalorder %s182, %s183
      %p195 = scmp.eq.s32.totalorder %s26, 1
      %p196 = por %p194, %p195
      %p198 = scmp.ne.s32.totalorder %s183, %s197
      %p199 = scmp.eq.s32.totalorder %s26, 0
      %p200 = por %p198, %p199
      %s202 = sadd.s32 %s201, 1
      %p205 = scmp.eq.s32.totalorder %s20, 1
      %p206 = scmp.ne.s32.totalorder %s201, %s203
      %p207 = scmp.eq.s32.totalorder %s20, 0
      %p208 = por %p206, %p207
      %p209 = scmp.ne.s32.totalorder %s201, %s203
      %p210 = scmp.eq.s32.totalorder %s25, 1
      %p211 = por %p209, %p210
      %p212 = scmp.ne.s32.totalorder %s203, %s204
      %p213 = scmp.eq.s32.totalorder %s25, 0
      %p214 = por %p212, %p213
      %p215 = scmp.ne.s32.totalorder %s203, %s204
      %p216 = scmp.eq.s32.totalorder %s26, 1
      %p217 = por %p215, %p216
      %p219 = scmp.ne.s32.totalorder %s204, %s218
      %p220 = scmp.eq.s32.totalorder %s26, 0
      %p221 = por %p219, %p220
      %s223 = sadd.s32 %s222, 1
      %p226 = scmp.eq.s32.totalorder %s20, 1
      %p227 = scmp.ne.s32.totalorder %s222, %s224
      %p228 = scmp.eq.s32.totalorder %s20, 0
      %p229 = por %p227, %p228
      %p230 = scmp.ne.s32.totalorder %s222, %s224
      %p231 = scmp.eq.s32.totalorder %s25, 1
      %p232 = por %p230, %p231
      %p233 = scmp.ne.s32.totalorder %s224, %s225
      %p234 = scmp.eq.s32.totalorder %s25, 0
      %p235 = por %p233, %p234
      %p236 = scmp.ne.s32.totalorder %s224, %s225
      %p237 = scmp.eq.s32.totalorder %s26, 1
      %p238 = por %p236, %p237
      %p240 = scmp.ne.s32.totalorder %s225, %s239
      %p241 = scmp.eq.s32.totalorder %s26, 0
      %p242 = por %p240, %p241
      %s244 = sadd.s32 %s243, 1
      %p247 = scmp.eq.s32.totalorder %s20, 1
      %p248 = scmp.ne.s32.totalorder %s243, %s245
      %p249 = scmp.eq.s32.totalorder %s20, 0
      %p250 = por %p248, %p249
      %p251 = scmp.ne.s32.totalorder %s243, %s245
      %p252 = scmp.eq.s32.totalorder %s25, 1
      %p253 = por %p251, %p252
      %p254 = scmp.ne.s32.totalorder %s245, %s246
      %p255 = scmp.eq.s32.totalorder %s25, 0
      %p256 = por %p254, %p255
      %p257 = scmp.ne.s32.totalorder %s245, %s246
      %p258 = scmp.eq.s32.totalorder %s26, 1
      %p259 = por %p257, %p258
      %p261 = scmp.ne.s32.totalorder %s246, %s260
      %p262 = scmp.eq.s32.totalorder %s26, 0
      %p263 = por %p261, %p262
      %s264 = ssub.s32 %s20, %s27
      %p265 = scmp.eq.s32.totalorder %s264, 0
      %s267 = sadd.s32 %s266, 1
      %s268 = scalar_select %p265, %s266, %s267
      %p271 = pneg %p265
      %p272 = scmp.eq.s32.totalorder %s20, 1
      %p273 = por %p271, %p272
      %p274 = scmp.ne.s32.totalorder %s266, %s269
      %p275 = scmp.eq.s32.totalorder %s20, 0
      %p276 = por %p274, %p275
      %p277 = scmp.ne.s32.totalorder %s266, %s269
      %p278 = scmp.eq.s32.totalorder %s25, 1
      %p279 = por %p277, %p278
      %p280 = scmp.ne.s32.totalorder %s269, %s270
      %p281 = scmp.eq.s32.totalorder %s25, 0
      %p282 = por %p280, %p281
      %p283 = scmp.ne.s32.totalorder %s269, %s270
      %p284 = scmp.eq.s32.totalorder %s26, 1
      %p285 = por %p283, %p284
      %p287 = scmp.ne.s32.totalorder %s270, %s286
      %p288 = scmp.eq.s32.totalorder %s26, 0
      %p289 = por %p287, %p288
      %p290 = scmp.le.s32.totalorder 1, %s20
      %p291 = scmp.lt.s32.totalorder %s20, 3
      %p292 = pnand %p290, %p291
      %p293 = pneg %p292
      // Predicated region
      $region9: #{tpu_custom_call.1} parent=5 // pred_check
        _
      $region10: #{tpu_custom_call.1} parent=5 // pred_check_branch
        %295 = sbr.rel (%p292) target = $region12
      $region11: #{tpu_custom_call.1} parent=5 // pred_region
        %s296 = ssub.s32 %s20, 1
        // Predicated region
        $region13: #{tpu_custom_call.1} parent=11 // pred_check
          %p297 = pneg %p67
        $region14: #{tpu_custom_call.1} parent=11 // pred_check_branch
          %299 = sbr.rel (%p297) target = $region16
        $region15: #{tpu_custom_call.1} parent=11 // pred_region
          _
        $region16: #{tpu_custom_call.1} parent=11 // pred_fallthru
          _
        // Predicated region
        $region17: #{tpu_custom_call.1} parent=11 // pred_check
          %p300 = pneg %p88
        $region18: #{tpu_custom_call.1} parent=11 // pred_check_branch
          %302 = sbr.rel (%p300) target = $region20
        $region19: #{tpu_custom_call.1} parent=11 // pred_region
          _
        $region20: #{tpu_custom_call.1} parent=11 // pred_fallthru
          _
        // Predicated region
        $region21: #{tpu_custom_call.1} parent=11 // pred_check
          %p303 = pneg %p109
        $region22: #{tpu_custom_call.1} parent=11 // pred_check_branch
          %305 = sbr.rel (%p303) target = $region24
        $region23: #{tpu_custom_call.1} parent=11 // pred_region
          _
        $region24: #{tpu_custom_call.1} parent=11 // pred_fallthru
          _
        // Predicated region
        $region25: #{tpu_custom_call.1} parent=11 // pred_check
          %p306 = pneg %p130
        $region26: #{tpu_custom_call.1} parent=11 // pred_check_branch
          %308 = sbr.rel (%p306) target = $region28
        $region27: #{tpu_custom_call.1} parent=11 // pred_region
          _
        $region28: #{tpu_custom_call.1} parent=11 // pred_fallthru
          _
        // Predicated region
        $region29: #{tpu_custom_call.1} parent=11 // pred_check
          %p309 = pneg %p151
        $region30: #{tpu_custom_call.1} parent=11 // pred_check_branch
          %311 = sbr.rel (%p309) target = $region32
        $region31: #{tpu_custom_call.1} parent=11 // pred_region
          _
        $region32: #{tpu_custom_call.1} parent=11 // pred_fallthru
          _
        // Predicated region
        $region33: #{tpu_custom_call.1} parent=11 // pred_check
          %p312 = pneg %p172
        $region34: #{tpu_custom_call.1} parent=11 // pred_check_branch
          %314 = sbr.rel (%p312) target = $region36
        $region35: #{tpu_custom_call.1} parent=11 // pred_region
          _
        $region36: #{tpu_custom_call.1} parent=11 // pred_fallthru
          _
        // Predicated region
        $region37: #{tpu_custom_call.1} parent=11 // pred_check
          %p315 = pneg %p193
        $region38: #{tpu_custom_call.1} parent=11 // pred_check_branch
          %317 = sbr.rel (%p315) target = $region40
        $region39: #{tpu_custom_call.1} parent=11 // pred_region
          _
        $region40: #{tpu_custom_call.1} parent=11 // pred_fallthru
          _
        // Predicated region
        $region41: #{tpu_custom_call.1} parent=11 // pred_check
          %p318 = pneg %p214
        $region42: #{tpu_custom_call.1} parent=11 // pred_check_branch
          %320 = sbr.rel (%p318) target = $region44
        $region43: #{tpu_custom_call.1} parent=11 // pred_region
          _
        $region44: #{tpu_custom_call.1} parent=11 // pred_fallthru
          _
        // Predicated region
        $region45: #{tpu_custom_call.1} parent=11 // pred_check
          %p321 = pneg %p235
        $region46: #{tpu_custom_call.1} parent=11 // pred_check_branch
          %323 = sbr.rel (%p321) target = $region48
        $region47: #{tpu_custom_call.1} parent=11 // pred_region
          _
        $region48: #{tpu_custom_call.1} parent=11 // pred_fallthru
          _
        // Predicated region
        $region49: #{tpu_custom_call.1} parent=11 // pred_check
          %p324 = pneg %p256
        $region50: #{tpu_custom_call.1} parent=11 // pred_check_branch
          %326 = sbr.rel (%p324) target = $region52
        $region51: #{tpu_custom_call.1} parent=11 // pred_region
          _
        $region52: #{tpu_custom_call.1} parent=11 // pred_fallthru
          _
      $region12: #{tpu_custom_call.1} parent=5 // pred_fallthru
        _
      %p327 = scmp.lt.s32.totalorder %s20, 2
      // Predicated region
      $region53: #{tpu_custom_call.1} parent=5 // pred_check
        %p328 = pneg %p327
      $region54: #{tpu_custom_call.1} parent=5 // pred_check_branch
        %330 = sbr.rel (%p328) target = $region56
      $region55: #{tpu_custom_call.1} parent=5 // pred_region
        // Predicated region
        $region57: #{tpu_custom_call.1} parent=55 // pred_check
          %p331 = pneg %p40
        $region58: #{tpu_custom_call.1} parent=55 // pred_check_branch
          %333 = sbr.rel (%p331) target = $region60
        $region59: #{tpu_custom_call.1} parent=55 // pred_region
          %p334 = scmp.lt.s32.totalorder %s20, 1
          %s335 = scalar_select %p334, %s20, 1
          %s336 = smul.addr %s335, 2
          %s337 = smul.addr %s336, 4
          %s338 = scalar_lea.vmem %s0, %s337
        $region60: #{tpu_custom_call.1} parent=55 // pred_fallthru
          _
      $region56: #{tpu_custom_call.1} parent=5 // pred_fallthru
        _
      %p339 = scmp.le.s32.totalorder 1, %s20
      %p340 = scmp.lt.s32.totalorder %s20, 3
      %p341 = pnand %p339, %p340
      %p342 = pneg %p341
      // Predicated region
      $region61: #{tpu_custom_call.1} parent=5 // pred_check
        _
      $region62: #{tpu_custom_call.1} parent=5 // pred_check_branch
        %344 = sbr.rel (%p341) target = $region64
      $region63: #{tpu_custom_call.1} parent=5 // pred_region
        %s345 = ssub.s32 %s20, 1
        %p346 = scmp.lt.s32.totalorder %s25, 1
        %s347 = scalar_select %p346, %s25, 1
        %s348 = smul.addr %s347, 2
        %s349 = smul.addr %s348, 4
        %s350 = scalar_lea.vmem %s0, %s349
        %p351 = pneg %p46
        %p352 = pneg %p43
        %p353 = pneg %p67
        %p354 = pneg %p64
        %p355 = pneg %p88
        %p356 = pneg %p85
        %p357 = pneg %p109
        %p358 = pneg %p106
        %p359 = pneg %p130
        %p360 = pneg %p127
        %p361 = pneg %p151
        %p362 = pneg %p148
        %p363 = pneg %p172
        %p364 = pneg %p169
        %p365 = pneg %p193
        %p366 = pneg %p190
        %p367 = pneg %p214
        %p368 = pneg %p211
        %p369 = pneg %p235
        %p370 = pneg %p232
        %p371 = pneg %p256
        %p372 = pneg %p253
        %p373 = pneg %p282
        %p374 = pneg %p279
        %s375 = sand.u32 %s269, 1
        %s376 = scalar_lea.sflag [#allocation4], %s375
        %s377 = sand.u32 %s269, 1
        %s378 = smul.addr %s377, 16
        %s379 = scalar_lea.vmem [#allocation3], %s378
        %p380 = scmp.lt.s32.totalorder %s25, 1
        %s381 = scalar_select %p380, %s25, 1
        %s382 = smul.addr %s381, 2
        %s383 = smul.addr %s382, 4
        %s384 = scalar_lea.vmem %s0, %s383
        %v386 = vld [vmem:[%s2] sm:$0xf]
        %v387 = vld [vmem:[%s384] sm:$0xff]
        %v389 = vunpack.c.l.b16 %v387
        %v390 = vunpack.c.h.b16 %v387
        %v391 = vpack.c.b16 %v389, %v389
        %v392 = vpack.c.b16 %v390, %v390
        %vm393 = vcmask 64512
        %v395 = vsel %vm393, %v386, 0
        %vm397 = vcmask 1043456
        %v399 = vsel %vm397, %v391, 0
        %v402 = vsel %vm397, %v392, 0
        %404 = vmatprep.subr.bf16.mxu0 %v402
        %405 = vmatpush1.bf16.msra.mxu0 %v399
        %406 = vmatprep.subr.bf16.mxu0 0
        %407 = vmatpush1.bf16.msra.mxu0 0
        %408 = vmatprep.subr.bf16.mxu0 0
        %409 = vmatpush1.bf16.msra.mxu0 0
        %410 = vmatprep.subr.bf16.mxu0 0
        %411 = vmatpush1.bf16.msra.mxu0 0
        %412 = vmatprep.subr.bf16.mxu0 0
        %413 = vmatpush1.bf16.msra.mxu0 0
        %414 = vmatprep.subr.bf16.mxu0 0
        %415 = vmatpush1.bf16.msra.mxu0 0
        %416 = vmatprep.subr.bf16.mxu0 0
        %417 = vmatpush1.bf16.msra.mxu0 0
        %418 = vmatprep.subr.bf16.mxu0 0
        %419 = vmatpush1.bf16.msra.mxu0 0
        %420 = vmatprep.subr.bf16.mxu0 0
        %421 = vmatpush1.bf16.msra.mxu0 0
        %422 = vmatprep.subr.bf16.mxu0 0
        %423 = vmatpush1.bf16.msra.mxu0 0
        %424 = vmatprep.subr.bf16.mxu0 0
        %425 = vmatpush1.bf16.msra.mxu0 0
        %426 = vmatprep.subr.bf16.mxu0 0
        %427 = vmatpush1.bf16.msra.mxu0 0
        %428 = vmatprep.subr.bf16.mxu0 0
        %429 = vmatpush1.bf16.msra.mxu0 0
        %430 = vmatprep.subr.bf16.mxu0 0
        %431 = vmatpush1.bf16.msra.mxu0 0
        %432 = vmatprep.subr.bf16.mxu0 0
        %433 = vmatpush1.bf16.msra.mxu0 0
        %434 = vmatprep.subr.bf16.mxu0 0
        %435 = vmatpush1.bf16.msra.mxu0 0
        %436 = vmatprep.mubr.bf16.mxu0 0
        %437 = vmatmul.mubr.bf16.gmra.mrb[0].mxu0 %v395
        %v438 = vpop.f32.mrb[0].mxu0
        %v439 = vadd.f32 0.0, %v438
        %v440 = vpop.f32.mrb[0].mxu0
        %v441 = vadd.f32 0.0, %v440
        %v442 = vpop.f32.mrb[0].mxu0
        %v443 = vpop.f32.mrb[0].mxu0
        %444 = vdwg.mxu0
        %v445 = vld [vmem:[%s3] sm:$0xff]
        %447 = vset.pattern.permute.xlu0 0
        %448 = vperm.xlu0 %447, %v445
        %v449 = vpop.permute.xlu0 %448
        %v451 = vmul.f32 %v439, %v449
        %v452 = vmul.f32 %v441, %v449
        %v453 = vld [vmem:[%s4] sm:$0xff]
        %455 = vset.pattern.permute.xlu0 0
        %456 = vperm.xlu0 %455, %v453
        %v457 = vpop.permute.xlu0 %456
        %v459 = vadd.f32 %v451, %v457
        %v460 = vadd.f32 %v452, %v457
        %v461 = vmax.f32 %v459, 0.0
        %v462 = vmax.f32 %v460, 0.0
        %463 = vst [vmem:[#allocation2] sm:$0xff] 0.0
        %464 = vst [vmem:[#allocation2 + $0x18] sm:$0xff] 0.0
        %465 = vst [vmem:[#allocation2 + $0x8] sm:$0xff] %v461
        %466 = vst [vmem:[#allocation2 + $0x10] sm:$0xff] %v462
        %v467 = vld [vmem:[%s1] ss:$2 sm:$0x3]
        %v469 = vlaneseq
        %v470 = vshrl.u32 %v469, 7
        %v471 = vsub.s32 0, %v470
        %v472 = vrot.slane %v467, %v471
        %v473 = vlaneseq
        %v474 = vshrl.u32 %v473, 7
        %v475 = vsub.s32 1, %v474
        %v476 = vrot.slane %v467, %v475
        %s477 = scalar_lea.vmem %s1, 1
        %v478 = vld [vmem:[%s477] ss:$2 sm:$0x3]
        %v480 = vlaneseq
        %v481 = vshrl.u32 %v480, 7
        %v482 = vsub.s32 0, %v481
        %v483 = vrot.slane %v478, %v482
        %v484 = vlaneseq
        %v485 = vshrl.u32 %v484, 7
        %v486 = vsub.s32 1, %v485
        %v487 = vrot.slane %v478, %v486
        %v488 = vld [vmem:[#allocation2] sm:$0xff]
        %v489 = vld [vmem:[#allocation2 + $0x8] sm:$0xff]
        %v490 = vld [vmem:[#allocation2 + $0x10] sm:$0xff]
        %491 = vrot.lane.b32.xlu0 %v472, 111
        %v492 = vpop.permute.xlu0 %491
        %493 = vrot.lane.b32.xlu0 %v476, 111
        %v494 = vpop.permute.xlu0 %493
        %vm495 = vcmask 908288
        %v496 = vsel %vm495, %v492, %v494
        %v500 = vmul.f32 %v488, %v492
        %v501 = vmul.f32 %v489, %v496
        %v502 = vmul.f32 %v490, %v494
        %503 = vrot.lane.b32.xlu0 %v483, 113
        %v504 = vpop.permute.xlu0 %503
        %505 = vrot.lane.b32.xlu0 %v487, 113
        %v506 = vpop.permute.xlu0 %505
        %vm507 = vcmask 924672
        %v508 = vsel %vm507, %v504, %v506
        %v512 = vmul.f32 %v488, %v504
        %v513 = vmul.f32 %v489, %v508
        %v514 = vmul.f32 %v490, %v506
        %515 = vrot.lane.b32.xlu0 %v472, 127
        %v516 = vpop.permute.xlu0 %515
        %517 = vrot.lane.b32.xlu0 %v476, 127
        %v518 = vpop.permute.xlu0 %517
        %vm519 = vcmask 1039360
        %v520 = vsel %vm519, %v516, %v518
        %v524 = vmul.f32 %v488, %v516
        %v525 = vmul.f32 %v489, %v520
        %v526 = vmul.f32 %v490, %v518
        %v527 = vld [vmem:[#allocation2 + $0x8] sm:$0xff]
        %v528 = vld [vmem:[#allocation2 + $0x10] sm:$0xff]
        %v529 = vld [vmem:[#allocation2 + $0x18] sm:$0xff]
        %530 = vrot.lane.b32.xlu0 %v483, 1
        %v531 = vpop.permute.xlu0 %530
        %532 = vrot.lane.b32.xlu0 %v487, 1
        %v533 = vpop.permute.xlu0 %532
        %vm534 = vcmask 7168
        %v535 = vsel %vm534, %v531, %v533
        %v539 = vmul.f32 %v527, %v531
        %v540 = vmul.f32 %v528, %v535
        %v541 = vmul.f32 %v529, %v533
        %542 = vrot.lane.b32.xlu0 %v472, 15
        %v543 = vpop.permute.xlu0 %542
        %544 = vrot.lane.b32.xlu0 %v476, 15
        %v545 = vpop.permute.xlu0 %544
        %vm546 = vcmask 121856
        %v547 = vsel %vm546, %v543, %v545
        %v551 = vmul.f32 %v527, %v543
        %v552 = vmul.f32 %v528, %v547
        %v553 = vmul.f32 %v529, %v545
        %554 = vrot.lane.b32.xlu0 %v483, 17
        %v555 = vpop.permute.xlu0 %554
        %556 = vrot.lane.b32.xlu0 %v487, 17
        %v557 = vpop.permute.xlu0 %556
        %vm558 = vcmask 138240
        %v559 = vsel %vm558, %v555, %v557
        %v563 = vmul.f32 %v527, %v555
        %v564 = vmul.f32 %v528, %v559
        %v565 = vmul.f32 %v529, %v557
        %569 = vrot.lane.b32.xlu0 %v488, 127
        %v570 = vpop.permute.xlu0 %569
        %571 = vrot.lane.b32.xlu0 %v489, 127
        %v572 = vpop.permute.xlu0 %571
        %573 = vrot.lane.b32.xlu0 %v490, 127
        %v574 = vpop.permute.xlu0 %573
        %v575 = vsel %vm519, %v570, %v572
        %v576 = vsel %vm519, %v572, %v574
        %583 = vrot.lane.b32.xlu0 %v512, 126
        %v584 = vpop.permute.xlu0 %583
        %585 = vrot.lane.b32.xlu0 %v513, 126
        %v586 = vpop.permute.xlu0 %585
        %587 = vrot.lane.b32.xlu0 %v514, 126
        %v588 = vpop.permute.xlu0 %587
        %vm589 = vcmask 1031168
        %v590 = vsel %vm589, %v584, %v586
        %v591 = vsel %vm589, %v586, %v588
        %598 = vrot.lane.b32.xlu0 %v524, 112
        %v599 = vpop.permute.xlu0 %598
        %600 = vrot.lane.b32.xlu0 %v525, 112
        %v601 = vpop.permute.xlu0 %600
        %602 = vrot.lane.b32.xlu0 %v526, 112
        %v603 = vpop.permute.xlu0 %602
        %vm604 = vcmask 916480
        %v605 = vsel %vm604, %v599, %v601
        %v606 = vsel %vm604, %v601, %v603
        %610 = vrot.lane.b32.xlu0 %v489, 111
        %v611 = vpop.permute.xlu0 %610
        %612 = vrot.lane.b32.xlu0 %v490, 111
        %v613 = vpop.permute.xlu0 %612
        %v614 = vsel %vm495, %v611, %v613
        %621 = vrot.lane.b32.xlu0 %v539, 110
        %v622 = vpop.permute.xlu0 %621
        %623 = vrot.lane.b32.xlu0 %v540, 110
        %v624 = vpop.permute.xlu0 %623
        %625 = vrot.lane.b32.xlu0 %v541, 110
        %v626 = vpop.permute.xlu0 %625
        %vm627 = vcmask 900096
        %v628 = vsel %vm627, %v622, %v624
        %v629 = vsel %vm627, %v624, %v626
        %636 = vrot.lane.b32.xlu0 %v551, 96
        %v637 = vpop.permute.xlu0 %636
        %638 = vrot.lane.b32.xlu0 %v552, 96
        %v639 = vpop.permute.xlu0 %638
        %640 = vrot.lane.b32.xlu0 %v553, 96
        %v641 = vpop.permute.xlu0 %640
        %vm642 = vcmask 785408
        %v643 = vsel %vm642, %v637, %v639
        %v644 = vsel %vm642, %v639, %v641
        %651 = vrot.lane.b32.xlu0 %v527, 95
        %v652 = vpop.permute.xlu0 %651
        %653 = vrot.lane.b32.xlu0 %v528, 95
        %v654 = vpop.permute.xlu0 %653
        %655 = vrot.lane.b32.xlu0 %v529, 95
        %v656 = vpop.permute.xlu0 %655
        %vm657 = vcmask 777216
        %v658 = vsel %vm657, %v652, %v654
        %v659 = vsel %vm657, %v654, %v656
        %666 = vrot.lane.b32.xlu0 %v563, 94
        %v667 = vpop.permute.xlu0 %666
        %668 = vrot.lane.b32.xlu0 %v564, 94
        %v669 = vpop.permute.xlu0 %668
        %670 = vrot.lane.b32.xlu0 %v565, 94
        %v671 = vpop.permute.xlu0 %670
        %vm672 = vcmask 769024
        %v673 = vsel %vm672, %v667, %v669
        %v674 = vsel %vm672, %v669, %v671
        %v678 = vpack.c.bf16 %v575, %v500
        %v679 = vpack.c.bf16 %v576, %v501
        %v680 = vpack.c.bf16 %v574, %v502
        %v681 = vpack.c.bf16 %v605, %v590
        %v682 = vpack.c.bf16 %v606, %v591
        %v683 = vpack.c.bf16 %v603, %v588
        %v684 = vpack.c.bf16 %v622, %v611
        %v685 = vpack.c.bf16 %v628, %v614
        %v686 = vpack.c.bf16 %v629, %v613
        %v687 = vpack.c.bf16 %v652, %v637
        %v688 = vpack.c.bf16 %v658, %v643
        %v689 = vpack.c.bf16 %v659, %v644
        %v690 = vpack.c.bf16 %v667, %v667
        %v691 = vpack.c.bf16 %v673, %v673
        %v692 = vpack.c.bf16 %v674, %v674
        %v693 = vld [vmem:[%s5] sm:$0xf]
        %709 = vrot.lane.b32.xlu0 %v678, 17
        %v710 = vpop.permute.xlu0 %709
        %711 = vrot.lane.b32.xlu0 %v679, 17
        %v712 = vpop.permute.xlu0 %711
        %713 = vrot.lane.b32.xlu0 %v680, 17
        %v714 = vpop.permute.xlu0 %713
        %715 = vrot.lane.b32.xlu0 %v681, 17
        %v716 = vpop.permute.xlu0 %715
        %717 = vrot.lane.b32.xlu0 %v682, 17
        %v718 = vpop.permute.xlu0 %717
        %719 = vrot.lane.b32.xlu0 %v683, 17
        %v720 = vpop.permute.xlu0 %719
        %721 = vrot.lane.b32.xlu0 %v684, 17
        %v722 = vpop.permute.xlu0 %721
        %723 = vrot.lane.b32.xlu0 %v685, 17
        %v724 = vpop.permute.xlu0 %723
        %725 = vrot.lane.b32.xlu0 %v686, 17
        %v726 = vpop.permute.xlu0 %725
        %727 = vrot.lane.b32.xlu0 %v687, 17
        %v728 = vpop.permute.xlu0 %727
        %729 = vrot.lane.b32.xlu0 %v688, 17
        %v730 = vpop.permute.xlu0 %729
        %731 = vrot.lane.b32.xlu0 %v689, 17
        %v732 = vpop.permute.xlu0 %731
        %733 = vrot.lane.b32.xlu0 %v690, 17
        %v734 = vpop.permute.xlu0 %733
        %735 = vrot.lane.b32.xlu0 %v691, 17
        %v736 = vpop.permute.xlu0 %735
        %737 = vrot.lane.b32.xlu0 %v692, 17
        %v738 = vpop.permute.xlu0 %737
        %vm739 = vcmask 138240
        %v740 = vsel %vm739, %v710, %v712
        %v741 = vsel %vm739, %v712, %v714
        %v742 = vsel %vm739, %v716, %v718
        %v743 = vsel %vm739, %v718, %v720
        %v744 = vsel %vm739, %v722, %v724
        %v745 = vsel %vm739, %v724, %v726
        %v746 = vsel %vm739, %v728, %v730
        %v747 = vsel %vm739, %v730, %v732
        %v748 = vsel %vm739, %v734, %v736
        %v749 = vsel %vm739, %v736, %v738
        %vm758 = vcmask 588800
        %v760 = vsel %vm758, %v693, 0
        %v763 = vsel %vm397, %v748, 0
        %v766 = vsel %vm397, %v749, 0
        %768 = vmatprep.subr.bf16.mxu0 %v741
        %769 = vmatpush1.bf16.msra.mxu0 %v740
        %770 = vmatprep.subr.bf16.mxu0 %v743
        %771 = vmatpush1.bf16.msra.mxu0 %v742
        %772 = vmatprep.subr.bf16.mxu0 %v745
        %773 = vmatpush1.bf16.msra.mxu0 %v744
        %774 = vmatprep.subr.bf16.mxu0 %v747
        %775 = vmatpush1.bf16.msra.mxu0 %v746
        %776 = vmatprep.subr.bf16.mxu0 %v766
        %777 = vmatpush1.bf16.msra.mxu0 %v763
        %778 = vmatprep.subr.bf16.mxu0 0
        %779 = vmatpush1.bf16.msra.mxu0 0
        %780 = vmatprep.subr.bf16.mxu0 0
        %781 = vmatpush1.bf16.msra.mxu0 0
        %782 = vmatprep.subr.bf16.mxu0 0
        %783 = vmatpush1.bf16.msra.mxu0 0
        %784 = vmatprep.subr.bf16.mxu0 0
        %785 = vmatpush1.bf16.msra.mxu0 0
        %786 = vmatprep.subr.bf16.mxu0 0
        %787 = vmatpush1.bf16.msra.mxu0 0
        %788 = vmatprep.subr.bf16.mxu0 0
        %789 = vmatpush1.bf16.msra.mxu0 0
        %790 = vmatprep.subr.bf16.mxu0 0
        %791 = vmatpush1.bf16.msra.mxu0 0
        %792 = vmatprep.subr.bf16.mxu0 0
        %793 = vmatpush1.bf16.msra.mxu0 0
        %794 = vmatprep.subr.bf16.mxu0 0
        %795 = vmatpush1.bf16.msra.mxu0 0
        %796 = vmatprep.subr.bf16.mxu0 0
        %797 = vmatpush1.bf16.msra.mxu0 0
        %798 = vmatprep.subr.bf16.mxu0 0
        %799 = vmatpush1.bf16.msra.mxu0 0
        %800 = vmatprep.mubr.bf16.mxu0 0
        %801 = vmatmul.mubr.bf16.gmra.mrb[0].mxu0 %v760
        %v802 = vpop.f32.mrb[0].mxu0
        %v803 = vadd.f32 0.0, %v802
        %v804 = vpop.f32.mrb[0].mxu0
        %v805 = vadd.f32 0.0, %v804
        %v806 = vpop.f32.mrb[0].mxu0
        %v807 = vpop.f32.mrb[0].mxu0
        %808 = vdwg.mxu0
        %v809 = vld [vmem:[%s6] sm:$0xff]
        %811 = vset.pattern.permute.xlu0 0
        %812 = vperm.xlu0 %811, %v809
        %v813 = vpop.permute.xlu0 %812
        %v815 = vmul.f32 %v803, %v813
        %v816 = vmul.f32 %v805, %v813
        %v817 = vld [vmem:[%s7] sm:$0xff]
        %819 = vset.pattern.permute.xlu0 0
        %820 = vperm.xlu0 %819, %v817
        %v821 = vpop.permute.xlu0 %820
        %v823 = vadd.f32 %v815, %v821
        %v824 = vadd.f32 %v816, %v821
        %v825 = vld [vmem:[%s8] sm:$0xf]
        %v826 = vpack.c.bf16 %v823, %v823
        %v827 = vpack.c.bf16 %v824, %v824
        %v829 = vsel %vm393, %v825, 0
        %v832 = vsel %vm397, %v826, 0
        %v835 = vsel %vm397, %v827, 0
        %837 = vmatprep.subr.bf16.mxu0 %v835
        %838 = vmatpush1.bf16.msra.mxu0 %v832
        %839 = vmatprep.subr.bf16.mxu0 0
        %840 = vmatpush1.bf16.msra.mxu0 0
        %841 = vmatprep.subr.bf16.mxu0 0
        %842 = vmatpush1.bf16.msra.mxu0 0
        %843 = vmatprep.subr.bf16.mxu0 0
        %844 = vmatpush1.bf16.msra.mxu0 0
        %845 = vmatprep.subr.bf16.mxu0 0
        %846 = vmatpush1.bf16.msra.mxu0 0
        %847 = vmatprep.subr.bf16.mxu0 0
        %848 = vmatpush1.bf16.msra.mxu0 0
        %849 = vmatprep.subr.bf16.mxu0 0
        %850 = vmatpush1.bf16.msra.mxu0 0
        %851 = vmatprep.subr.bf16.mxu0 0
        %852 = vmatpush1.bf16.msra.mxu0 0
        %853 = vmatprep.subr.bf16.mxu0 0
        %854 = vmatpush1.bf16.msra.mxu0 0
        %855 = vmatprep.subr.bf16.mxu0 0
        %856 = vmatpush1.bf16.msra.mxu0 0
        %857 = vmatprep.subr.bf16.mxu0 0
        %858 = vmatpush1.bf16.msra.mxu0 0
        %859 = vmatprep.subr.bf16.mxu0 0
        %860 = vmatpush1.bf16.msra.mxu0 0
        %861 = vmatprep.subr.bf16.mxu0 0
        %862 = vmatpush1.bf16.msra.mxu0 0
        %863 = vmatprep.subr.bf16.mxu0 0
        %864 = vmatpush1.bf16.msra.mxu0 0
        %865 = vmatprep.subr.bf16.mxu0 0
        %866 = vmatpush1.bf16.msra.mxu0 0
        %867 = vmatprep.subr.bf16.mxu0 0
        %868 = vmatpush1.bf16.msra.mxu0 0
        %869 = vmatprep.mubr.bf16.mxu0 0
        %870 = vmatmul.mubr.bf16.gmra.mrb[0].mxu0 %v829
        %v871 = vpop.f32.mrb[0].mxu0
        %v872 = vadd.f32 0.0, %v871
        %v873 = vpop.f32.mrb[0].mxu0
        %v874 = vadd.f32 0.0, %v873
        %v875 = vpop.f32.mrb[0].mxu0
        %v876 = vpop.f32.mrb[0].mxu0
        %877 = vdwg.mxu0
        %v878 = vld [vmem:[%s9] sm:$0xff]
        %880 = vset.pattern.permute.xlu0 0
        %881 = vperm.xlu0 %880, %v878
        %v882 = vpop.permute.xlu0 %881
        %v884 = vmul.f32 %v872, %v882
        %v885 = vmul.f32 %v874, %v882
        %v886 = vld [vmem:[%s10] sm:$0xff]
        %888 = vset.pattern.permute.xlu0 0
        %889 = vperm.xlu0 %888, %v886
        %v890 = vpop.permute.xlu0 %889
        %v892 = vadd.f32 %v884, %v890
        %v893 = vadd.f32 %v885, %v890
        %v894 = vmax.f32 %v892, 0.0
        %v895 = vmax.f32 %v893, 0.0
        %896 = vst [vmem:[%s379] sm:$0xff] %v894
        %897 = vst [vmem:[%s379 + $0x8] sm:$0xff] %v895
        %s898 = sand.u32 %s269, 1
        %s899 = scalar_lea.sflag [#allocation4], %s898
        %s900 = sand.u32 %s269, 1
        %s901 = smul.addr %s900, 16
        %s902 = scalar_lea.vmem [#allocation3], %s901
        // Predicated region
        $region65: #{tpu_custom_call.1} parent=63 // pred_check
          %p903 = pneg %p279
        $region66: #{tpu_custom_call.1} parent=63 // pred_check_branch
          %905 = sbr.rel (%p903) target = $region68
        $region67: #{tpu_custom_call.1} parent=63 // pred_region
          %s907 = ssub.s32 256, 256
          %908 = vsyncadd %s899, %s907
          %s909 = smul.addr %s25, 2
          %s910 = smul.addr %s909, 128
          %s911 = scalar_lea.hbm %s11, %s910
          %s913 = sshll.u32 %s902, 4
          %s914 = int_to_ptr.vmem [resolvable:$true] %s913
          %916 = dma.vmem_to_hbm [thread:$0]  %s914, 256, %s911, %s899
        $region68: #{tpu_custom_call.1} parent=63 // pred_fallthru
          _
      $region64: #{tpu_custom_call.1} parent=5 // pred_fallthru
        _
      %p917 = scmp.le.s32.totalorder 2, %s20
      // Predicated region
      $region69: #{tpu_custom_call.1} parent=5 // pred_check
        %p918 = pneg %p917
      $region70: #{tpu_custom_call.1} parent=5 // pred_check_branch
        %920 = sbr.rel (%p918) target = $region72
      $region71: #{tpu_custom_call.1} parent=5 // pred_region
        %s921 = ssub.s32 %s20, 2
        // Predicated region
        $region73: #{tpu_custom_call.1} parent=71 // pred_check
          %p922 = pneg %p285
        $region74: #{tpu_custom_call.1} parent=71 // pred_check_branch
          %924 = sbr.rel (%p922) target = $region76
        $region75: #{tpu_custom_call.1} parent=71 // pred_region
          %s925 = sand.u32 %s270, 1
          %s926 = scalar_lea.sflag [#allocation4], %s925
          %s927 = sand.u32 %s270, 1
          %s928 = smul.addr %s927, 16
          %s929 = scalar_lea.vmem [#allocation3], %s928
          %930 = dma.done %s926, 256
        $region76: #{tpu_custom_call.1} parent=71 // pred_fallthru
          _
      $region72: #{tpu_custom_call.1} parent=5 // pred_fallthru
        _
    $region6: #{tpu_custom_call.1} parent=1 // loop_footer
      %s24 = sadd.s32 1, %s20
    $region7: #{tpu_custom_call.1} parent=1 // loop_footer_branch
      %19 = sbr.rel target = $region3
    $region8: #{tpu_custom_call.1} parent=1 // loop_exit
      _
    %931 = vsyncpa [#allocation4], 1
    %s932 = scalar_lea.sflag [#allocation4], 1
    %933 = vsyncpa %s932, 1

</llo_original>
